<compile_context>
chip_gen: v5e
topology: v5e:2x2
jax: 0.10.0
libtpu: 0.0.40
codegen_flags: <defaults>
</compile_context>

<pallas_src>
import functools

import jax
import jax.numpy as jnp
from jax.experimental import pallas as pl
from jax.experimental.pallas import tpu as pltpu


def shallow_mlp_kernel(x_ref, w1_ref, b1_ref, w2_ref, b2_ref, w3_ref, o_ref,
                       *, ew_dtype):
    # x block arrives as (TM, IN) f32; cast to bf16 in-kernel (MXU-native).
    x_bf = x_ref[...].astype(jnp.bfloat16)
    # Layer 1: contract over IN of both operands -> (H, TM).  The batch lives
    # on the lane axis and no transpose of x is ever materialized.
    h1 = jax.lax.dot_general(
        w1_ref[...], x_bf, (((1,), (1,)), ((), ())),
        preferred_element_type=jnp.float32)
    # Bias + ReLU (+ downcast for the next MXU op).  ew_dtype is bf16 on
    # v6e/v7x (bf16 VALU halves these passes), f32 on v5e.
    h1 = jnp.maximum(h1.astype(ew_dtype) + b1_ref[...], 0).astype(jnp.bfloat16)
    # Layer 2: (H, H) @ (H, TM) -> (H, TM) on the MXU (f32 accumulate).
    h2 = jnp.dot(w2_ref[...], h1, preferred_element_type=jnp.float32)
    h2 = jnp.maximum(h2 + b2_ref[...], 0.0)
    # Output layer (H -> 1, no bias): VPU multiply + sublane (XLU) reduce,
    # keeping the MXU slot free.  (1, TM) result is a lane-dense store.
    o_ref[...] = jnp.sum(h2 * w3_ref[...], axis=0, keepdims=True)


def _elementwise_dtype():
    # bf16 elementwise only where the VPU has a bf16 path (v6e / v7x).
    try:
        kind = jax.devices()[0].device_kind.lower()
    except Exception:
        return jnp.float32
    return jnp.bfloat16 if ("v6" in kind or "v7" in kind) else jnp.float32


@jax.jit
def shallow_network_forward(x, w1, b1, w2, b2, w3):
    """Forward pass of ShallowNetwork.

    x : (B, input_dim) f32
    w1: (hidden, input_dim), b1: (hidden,)   -- torch nn.Linear layout
    w2: (hidden, hidden),    b2: (hidden,)
    w3: (1, hidden)                          -- output layer, no bias
    returns (B, 1) f32
    """
    batch, input_dim = x.shape
    hidden = w1.shape[0]
    ew_dtype = _elementwise_dtype()

    # ---- batch tiling ------------------------------------------------------
    # Large lane-dense tiles amortize the ~0.35us fixed per-grid-step cost;
    # cap TM so the grid keeps >= 2 parallel steps for v7x's two TensorCores.
    TM_MAX = 8192
    b128 = pl.cdiv(batch, 128) * 128
    tm = min(TM_MAX, max(128, pl.cdiv(pl.cdiv(b128, 2), 128) * 128))

    # Pad only when the batch isn't already lane-aligned (no extra HBM pass
    # over x in the common multiple-of-128 case).  Padded / partial-block rows
    # produce garbage lanes that never mix with real ones and are sliced off.
    if batch % 128 != 0:
        x = jnp.pad(x, ((0, b128 - batch), (0, 0)))
    n_rows = x.shape[0]
    grid = pl.cdiv(n_rows, tm)

    w1_bf = w1.astype(jnp.bfloat16)
    w2_bf = w2.astype(jnp.bfloat16)
    b1_col = b1.reshape(hidden, 1).astype(ew_dtype)
    b2_col = b2.reshape(hidden, 1).astype(jnp.float32)
    w3_col = w3.reshape(hidden, 1).astype(jnp.float32)

    resident = lambda a: pl.BlockSpec(a.shape, lambda i: (0,) * a.ndim)

    out_t = pl.pallas_call(
        functools.partial(shallow_mlp_kernel, ew_dtype=ew_dtype),
        out_shape=jax.ShapeDtypeStruct((1, n_rows), jnp.float32),
        grid=(grid,),
        in_specs=[
            pl.BlockSpec((tm, input_dim), lambda i: (i, 0)),   # x: streamed
            resident(w1_bf), resident(b1_col),                 # params resident
            resident(w2_bf), resident(b2_col),
            resident(w3_col),
        ],
        out_specs=pl.BlockSpec((1, tm), lambda i: (0, i)),
        compiler_params=pltpu.CompilerParams(
            # Independent batch tiles -> shard across v7x's 2 TensorCores.
            dimension_semantics=("parallel",),
            # (TM,16) f32 x blocks are lane-padded to 128 lanes in VMEM
            # (~4 MiB each at TM=8192); clear v5e's 16 MiB scoped default.
            vmem_limit_bytes=40 * 1024 * 1024),
    )(x, w1_bf, b1_col, w2_bf, b2_col, w3_col)

    return out_t[0, :batch].reshape(batch, 1)


def _xavier_uniform(key, shape):
    # torch.nn.init.xavier_uniform_ (gain=1) for a 2D weight stored (out, in).
    fan_out, fan_in = shape
    bound = float(jnp.sqrt(6.0 / (fan_in + fan_out)))
    return jax.random.uniform(key, shape, jnp.float32, -bound, bound)


def _reference(x, w1, b1, w2, b2, w3):
    # Pure-JAX reference matching the kernel's bf16-input / f32-accumulate dots.
    bf = lambda a: a.astype(jnp.bfloat16).astype(jnp.float32)
    h1 = jnp.maximum(bf(x) @ bf(w1).T + b1, 0.0)
    h2 = jnp.maximum(bf(h1) @ bf(w2).T + b2, 0.0)
    return h2 @ w3.T


if __name__ == "__main__":
    input_dim, hidden_size = 16, 32

    key = jax.random.PRNGKey(0)
    kx, kx2, k1, kb1, k2, kb2, k3 = jax.random.split(key, 7)

    # Weights in torch nn.Linear layout (out_features, in_features).
    w1 = _xavier_uniform(k1, (hidden_size, input_dim))
    b1 = jax.random.uniform(kb1, (hidden_size,), jnp.float32, -0.1, 0.1)
    w2 = _xavier_uniform(k2, (hidden_size, hidden_size))
    b2 = jax.random.uniform(kb2, (hidden_size,), jnp.float32, -0.1, 0.1)
    w3 = _xavier_uniform(k3, (1, hidden_size))

    # Small demo batch (single tile, padded 8 -> 128).
    x_small = jax.random.normal(kx, (8, input_dim), jnp.float32)
    out_small = shallow_network_forward(x_small, w1, b1, w2, b2, w3)
    jax.block_until_ready(out_small)
    ref_small = _reference(x_small, w1, b1, w2, b2, w3)
    assert out_small.shape == (8, 1)
    assert jnp.allclose(out_small, ref_small, atol=2e-2, rtol=2e-2)

    # Ragged multi-tile batch to exercise padding + grid > 1 + partial blocks.
    x_big = jax.random.normal(kx2, (260, input_dim), jnp.float32)
    out_big = shallow_network_forward(x_big, w1, b1, w2, b2, w3)
    jax.block_until_ready(out_big)
    ref_big = _reference(x_big, w1, b1, w2, b2, w3)
    assert out_big.shape == (260, 1)
    assert jnp.allclose(out_big, ref_big, atol=2e-2, rtol=2e-2)

    print("KERNEL_OK")
</pallas_src>

<mosaic_0001>
module attributes {stable_mosaic.version = 11 : i64} {
  func.func @shallow_mlp_kernel(%arg0: i32, %arg1: memref<128x16xf32, #tpu.memory_space<vmem>>, %arg2: memref<32x16xbf16, #tpu.memory_space<vmem>>, %arg3: memref<32x1xf32, #tpu.memory_space<vmem>>, %arg4: memref<32x32xbf16, #tpu.memory_space<vmem>>, %arg5: memref<32x1xf32, #tpu.memory_space<vmem>>, %arg6: memref<32x1xf32, #tpu.memory_space<vmem>>, %arg7: memref<1x128xf32, #tpu.memory_space<vmem>>) attributes {dimension_semantics = [#tpu.dimension_semantics<parallel>], iteration_bounds = array<i64: 1>, scalar_prefetch = 0 : i64, scratch_operands = 0 : i64, tpu.core_type = #tpu.core_type<tc>, window_params = [{transform_indices = @transform_0, window_bounds = array<i64: 128, 16>}, {pipeline_mode = #tpu.pipeline_mode<synchronous>, transform_indices = @transform_1, window_bounds = array<i64: 32, 16>}, {pipeline_mode = #tpu.pipeline_mode<synchronous>, transform_indices = @transform_2, window_bounds = array<i64: 32, 1>}, {pipeline_mode = #tpu.pipeline_mode<synchronous>, transform_indices = @transform_3, window_bounds = array<i64: 32, 32>}, {pipeline_mode = #tpu.pipeline_mode<synchronous>, transform_indices = @transform_4, window_bounds = array<i64: 32, 1>}, {pipeline_mode = #tpu.pipeline_mode<synchronous>, transform_indices = @transform_5, window_bounds = array<i64: 32, 1>}, {transform_indices = @transform_6, window_bounds = array<i64: 1, 128>}]} {
    %c0 = arith.constant 0 : index
    %c0_0 = arith.constant 0 : index
    %0 = vector.load %arg1[%c0, %c0_0] : memref<128x16xf32, #tpu.memory_space<vmem>>, vector<128x16xf32>
    %1 = arith.truncf %0 : vector<128x16xf32> to vector<128x16xbf16>
    %c0_1 = arith.constant 0 : index
    %c0_2 = arith.constant 0 : index
    %2 = vector.load %arg2[%c0_1, %c0_2] : memref<32x16xbf16, #tpu.memory_space<vmem>>, vector<32x16xbf16>
    %cst = arith.constant dense<0.000000e+00> : vector<32x128xf32>
    %3 = tpu.matmul %2, %1, %cst {dimension_numbers = #tpu.dot_dimension_numbers<[1], [1], [0], [0], [0, 0, 1, 0], [], []>} : vector<32x16xbf16>, vector<128x16xbf16>, vector<32x128xf32> -> vector<32x128xf32>
    %c0_3 = arith.constant 0 : index
    %c0_4 = arith.constant 0 : index
    %4 = vector.load %arg3[%c0_3, %c0_4] : memref<32x1xf32, #tpu.memory_space<vmem>>, vector<32x1xf32>
    %5 = vector.broadcast %4 : vector<32x1xf32> to vector<32x128xf32>
    %6 = arith.addf %3, %5 : vector<32x128xf32>
    %cst_5 = arith.constant 0.000000e+00 : f32
    %7 = vector.broadcast %cst_5 : f32 to vector<32x128xf32>
    %8 = arith.maximumf %6, %7 : vector<32x128xf32>
    %9 = arith.truncf %8 : vector<32x128xf32> to vector<32x128xbf16>
    %c0_6 = arith.constant 0 : index
    %c0_7 = arith.constant 0 : index
    %10 = vector.load %arg4[%c0_6, %c0_7] : memref<32x32xbf16, #tpu.memory_space<vmem>>, vector<32x32xbf16>
    %cst_8 = arith.constant dense<0.000000e+00> : vector<32x128xf32>
    %11 = tpu.matmul %10, %9, %cst_8 {dimension_numbers = #tpu.dot_dimension_numbers<[1], [0], [0], [1], [0, 0, 1, 1], [], []>} : vector<32x32xbf16>, vector<32x128xbf16>, vector<32x128xf32> -> vector<32x128xf32>
    %c0_9 = arith.constant 0 : index
    %c0_10 = arith.constant 0 : index
    %12 = vector.load %arg5[%c0_9, %c0_10] : memref<32x1xf32, #tpu.memory_space<vmem>>, vector<32x1xf32>
    %13 = vector.broadcast %12 : vector<32x1xf32> to vector<32x128xf32>
    %14 = arith.addf %11, %13 : vector<32x128xf32>
    %cst_11 = arith.constant 0.000000e+00 : f32
    %15 = vector.broadcast %cst_11 : f32 to vector<32x128xf32>
    %16 = arith.maximumf %14, %15 : vector<32x128xf32>
    %c0_12 = arith.constant 0 : index
    %c0_13 = arith.constant 0 : index
    %17 = vector.load %arg6[%c0_12, %c0_13] : memref<32x1xf32, #tpu.memory_space<vmem>>, vector<32x1xf32>
    %18 = vector.broadcast %17 : vector<32x1xf32> to vector<32x128xf32>
    %19 = arith.mulf %16, %18 : vector<32x128xf32>
    %cst_14 = arith.constant dense<0.000000e+00> : vector<128xf32>
    %20 = vector.multi_reduction <add>, %19, %cst_14 [0] : vector<32x128xf32> to vector<128xf32>
    %21 = vector.shape_cast %20 : vector<128xf32> to vector<1x128xf32>
    %c0_15 = arith.constant 0 : index
    %c0_16 = arith.constant 0 : index
    %22 = vector.load %arg7[%c0_15, %c0_16] : memref<1x128xf32, #tpu.memory_space<vmem>>, vector<1x128xf32>
    tpu.vector_store %arg7[%c0_15, %c0_16], %21 {strides = array<i32>} : memref<1x128xf32, #tpu.memory_space<vmem>>, vector<1x128xf32>,
    return
  }
  func.func @transform_0(%arg0: i32) -> (i32, i32) {
    %c0_i32 = arith.constant 0 : i32
    %c0_i32_0 = arith.constant 0 : i32
    return %arg0, %c0_i32 : i32, i32
  }
  func.func @transform_1(%arg0: i32) -> (i32, i32) {
    %c0_i32 = arith.constant 0 : i32
    %c0_i32_0 = arith.constant 0 : i32
    %c0_i32_1 = arith.constant 0 : i32
    return %c0_i32, %c0_i32_0 : i32, i32
  }
  func.func @transform_2(%arg0: i32) -> (i32, i32) {
    %c0_i32 = arith.constant 0 : i32
    %c0_i32_0 = arith.constant 0 : i32
    %c0_i32_1 = arith.constant 0 : i32
    return %c0_i32, %c0_i32_0 : i32, i32
  }
  func.func @transform_3(%arg0: i32) -> (i32, i32) {
    %c0_i32 = arith.constant 0 : i32
    %c0_i32_0 = arith.constant 0 : i32
    %c0_i32_1 = arith.constant 0 : i32
    return %c0_i32, %c0_i32_0 : i32, i32
  }
  func.func @transform_4(%arg0: i32) -> (i32, i32) {
    %c0_i32 = arith.constant 0 : i32
    %c0_i32_0 = arith.constant 0 : i32
    %c0_i32_1 = arith.constant 0 : i32
    return %c0_i32, %c0_i32_0 : i32, i32
  }
  func.func @transform_5(%arg0: i32) -> (i32, i32) {
    %c0_i32 = arith.constant 0 : i32
    %c0_i32_0 = arith.constant 0 : i32
    %c0_i32_1 = arith.constant 0 : i32
    return %c0_i32, %c0_i32_0 : i32, i32
  }
  func.func @transform_6(%arg0: i32) -> (i32, i32) {
    %c0_i32 = arith.constant 0 : i32
    %c0_i32_0 = arith.constant 0 : i32
    return %c0_i32, %arg0 : i32, i32
  }
}

</mosaic_0001>

<llo_original>
// kernel: shallow_network_forward.1
$region0: #{shallow_network_forward.1}
  #allocation0 [shape = 'u32[]', space=smem, size = 0x4, offset = 0x4, fixed_abs, tag = 'smem constant byte address 0x4 - core index']
  #allocation1 [shape = 'u32[72,128]{1,0:T(1,128)}', space=vmem, size = 0x9000, scoped, tag = 'internal scratch']
  %s0 = inlined_call_operand.vmem [shape: f32[128,16], index: 0, kind: input, shape index: {}]
  %s1 = inlined_call_operand.vmem [shape: bf16[32,16], index: 1, kind: input, shape index: {}]
  %s2 = inlined_call_operand.vmem [shape: f32[32,1], index: 2, kind: input, shape index: {}]
  %s3 = inlined_call_operand.vmem [shape: bf16[32,32], index: 3, kind: input, shape index: {}]
  %s4 = inlined_call_operand.vmem [shape: f32[32,1], index: 4, kind: input, shape index: {}]
  %s5 = inlined_call_operand.vmem [shape: f32[32,1], index: 5, kind: input, shape index: {}]
  %s6 = inlined_call_operand.vmem [shape: f32[1,128], index: 6, kind: output, shape index: {}]
  %s7 = sld [smem:[#allocation0]]
  $region34: #{shallow_network_forward.1} parent=0
    _
  %s9 = ssub.s32 1, %s7
  %s10 = scalar_select 0, %s9, %s7
  // Predicated region
  $region2: #{shallow_network_forward.1} parent=0 // pred_check
    _
  $region3: #{shallow_network_forward.1} parent=0 // pred_check_branch
    %12 = sbr.rel (0) target = $region5
  $region4: #{shallow_network_forward.1} parent=0 // pred_region
    _
  $region5: #{shallow_network_forward.1} parent=0 // pred_fallthru
    _
  // Predicated region
  $region6: #{shallow_network_forward.1} parent=0 // pred_check
    _
  $region7: #{shallow_network_forward.1} parent=0 // pred_check_branch
    %14 = sbr.rel (0) target = $region9
  $region8: #{shallow_network_forward.1} parent=0 // pred_region
    _
  $region9: #{shallow_network_forward.1} parent=0 // pred_fallthru
    _
  // Predicated region
  $region10: #{shallow_network_forward.1} parent=0 // pred_check
    _
  $region11: #{shallow_network_forward.1} parent=0 // pred_check_branch
    %16 = sbr.rel (0) target = $region13
  $region12: #{shallow_network_forward.1} parent=0 // pred_region
    _
  $region13: #{shallow_network_forward.1} parent=0 // pred_fallthru
    _
  // Predicated region
  $region14: #{shallow_network_forward.1} parent=0 // pred_check
    _
  $region15: #{shallow_network_forward.1} parent=0 // pred_check_branch
    %18 = sbr.rel (0) target = $region17
  $region16: #{shallow_network_forward.1} parent=0 // pred_region
    _
  $region17: #{shallow_network_forward.1} parent=0 // pred_fallthru
    _
  // Predicated region
  $region18: #{shallow_network_forward.1} parent=0 // pred_check
    _
  $region19: #{shallow_network_forward.1} parent=0 // pred_check_branch
    %20 = sbr.rel (0) target = $region21
  $region20: #{shallow_network_forward.1} parent=0 // pred_region
    _
  $region21: #{shallow_network_forward.1} parent=0 // pred_fallthru
    _
  // Predicated region
  $region22: #{shallow_network_forward.1} parent=0 // pred_check
    _
  $region23: #{shallow_network_forward.1} parent=0 // pred_check_branch
    %22 = sbr.rel (0) target = $region25
  $region24: #{shallow_network_forward.1} parent=0 // pred_region
    _
  $region25: #{shallow_network_forward.1} parent=0 // pred_fallthru
    _
  %v24 = vld [vmem:[%s0] sm:$0xff]
  %v25 = vld [vmem:[%s0 + $0x8] sm:$0xff]
  %v26 = vld [vmem:[%s0 + $0x10] sm:$0xff]
  %v27 = vld [vmem:[%s0 + $0x18] sm:$0xff]
  %v28 = vld [vmem:[%s0 + $0x20] sm:$0xff]
  %v29 = vld [vmem:[%s0 + $0x28] sm:$0xff]
  %v30 = vld [vmem:[%s0 + $0x30] sm:$0xff]
  %v31 = vld [vmem:[%s0 + $0x38] sm:$0xff]
  %v32 = vld [vmem:[%s0 + $0x40] sm:$0xff]
  %v33 = vld [vmem:[%s0 + $0x48] sm:$0xff]
  %v34 = vld [vmem:[%s0 + $0x50] sm:$0xff]
  %v35 = vld [vmem:[%s0 + $0x58] sm:$0xff]
  %v36 = vld [vmem:[%s0 + $0x60] sm:$0xff]
  %v37 = vld [vmem:[%s0 + $0x68] sm:$0xff]
  %v38 = vld [vmem:[%s0 + $0x70] sm:$0xff]
  %v39 = vld [vmem:[%s0 + $0x78] sm:$0xff]
  %v40 = vpack.c.bf16 %v25, %v24
  %v41 = vpack.c.bf16 %v27, %v26
  %v42 = vpack.c.bf16 %v29, %v28
  %v43 = vpack.c.bf16 %v31, %v30
  %v44 = vpack.c.bf16 %v33, %v32
  %v45 = vpack.c.bf16 %v35, %v34
  %v46 = vpack.c.bf16 %v37, %v36
  %v47 = vpack.c.bf16 %v39, %v38
  %v48 = vld [vmem:[%s1] sm:$0xf]
  %v49 = vld [vmem:[%s1 + $0x4] sm:$0xf]
  %v50 = vld [vmem:[%s1 + $0x8] sm:$0xf]
  %v51 = vld [vmem:[%s1 + $0xc] sm:$0xf]
  %v52 = vld [vmem:[%s2] sm:$0xff]
  %v53 = vld [vmem:[%s2 + $0x8] sm:$0xff]
  %v54 = vld [vmem:[%s2 + $0x10] sm:$0xff]
  %v55 = vld [vmem:[%s2 + $0x18] sm:$0xff]
  %57 = vset.pattern.permute.xlu0 0
  %58 = vperm.xlu0 %57, %v52
  %v59 = vpop.permute.xlu0 %58
  %62 = vset.pattern.permute.xlu0 0
  %63 = vperm.xlu0 %62, %v53
  %v64 = vpop.permute.xlu0 %63
  %67 = vset.pattern.permute.xlu0 0
  %68 = vperm.xlu0 %67, %v54
  %v69 = vpop.permute.xlu0 %68
  %72 = vset.pattern.permute.xlu0 0
  %73 = vperm.xlu0 %72, %v55
  %v74 = vpop.permute.xlu0 %73
  %v80 = vunpack.c.l.b16 %v48
  %v81 = vunpack.c.l.b16 %v49
  %v82 = vunpack.c.l.b16 %v50
  %v83 = vunpack.c.l.b16 %v51
  %v84 = vpack.c.b16 %v81, %v80
  %v85 = vpack.c.b16 %v83, %v82
  %vm86 = vcmask 130048
  %v88 = vsel %vm86, %v84, 0
  %v91 = vsel %vm86, %v85, 0
  %v94 = vsel %vm86, %v40, 0
  %v97 = vsel %vm86, %v41, 0
  %v100 = vsel %vm86, %v42, 0
  %v103 = vsel %vm86, %v43, 0
  %v106 = vsel %vm86, %v44, 0
  %v109 = vsel %vm86, %v45, 0
  %v112 = vsel %vm86, %v46, 0
  %v115 = vsel %vm86, %v47, 0
  %117 = vmatpush.bf16.xpose.msra.mxu0 %v115
  %118 = vmatpush.bf16.xpose.msra.mxu0 %v112
  %119 = vmatpush.bf16.xpose.msra.mxu0 %v109
  %120 = vmatpush.bf16.xpose.msra.mxu0 %v106
  %121 = vmatpush.bf16.xpose.msra.mxu0 %v103
  %122 = vmatpush.bf16.xpose.msra.mxu0 %v100
  %123 = vmatpush.bf16.xpose.msra.mxu0 %v97
  %124 = vmatpush.bf16.xpose.msra.mxu0 %v94
  %125 = vmatmul.bf16.gmra.mxu0 %v88
  %v126 = vpop.f32.mrf.mxu0
  %v127 = vadd.f32 %v59, %v126
  %v128 = vpop.f32.mrf.mxu0
  %v129 = vadd.f32 %v64, %v128
  %130 = vmatmul.bf16.gmra.mxu0 %v91
  %v131 = vpop.f32.mrf.mxu0
  %v132 = vadd.f32 %v69, %v131
  %v133 = vpop.f32.mrf.mxu0
  %v134 = vadd.f32 %v74, %v133
  %135 = vdwg.mxu0
  %v136 = vmax.f32 %v127, 0.0
  %v137 = vmax.f32 %v129, 0.0
  %v138 = vmax.f32 %v132, 0.0
  %v139 = vmax.f32 %v134, 0.0
  %v140 = vpack.c.bf16 %v137, %v136
  %v141 = vpack.c.bf16 %v139, %v138
  %v142 = vld [vmem:[%s3] sm:$0xf]
  %v143 = vld [vmem:[%s3 + $0x4] sm:$0xf]
  %v144 = vld [vmem:[%s3 + $0x8] sm:$0xf]
  %v145 = vld [vmem:[%s3 + $0xc] sm:$0xf]
  %v146 = vld [vmem:[%s4] sm:$0xff]
  %v147 = vld [vmem:[%s4 + $0x8] sm:$0xff]
  %v148 = vld [vmem:[%s4 + $0x10] sm:$0xff]
  %v149 = vld [vmem:[%s4 + $0x18] sm:$0xff]
  %151 = vset.pattern.permute.xlu0 0
  %152 = vperm.xlu0 %151, %v146
  %v153 = vpop.permute.xlu0 %152
  %156 = vset.pattern.permute.xlu0 0
  %157 = vperm.xlu0 %156, %v147
  %v158 = vpop.permute.xlu0 %157
  %161 = vset.pattern.permute.xlu0 0
  %162 = vperm.xlu0 %161, %v148
  %v163 = vpop.permute.xlu0 %162
  %166 = vset.pattern.permute.xlu0 0
  %167 = vperm.xlu0 %166, %v149
  %v168 = vpop.permute.xlu0 %167
  %v174 = vunpack.c.l.b16 %v142
  %v175 = vunpack.c.l.b16 %v143
  %v176 = vunpack.c.l.b16 %v144
  %v177 = vunpack.c.l.b16 %v145
  %v178 = vpack.c.b16 %v175, %v174
  %v179 = vpack.c.b16 %v177, %v176
  %vm180 = vcmask 261120
  %v182 = vsel %vm180, %v178, 0
  %v185 = vsel %vm180, %v179, 0
  %187 = vmatpush.bf16.msra.mxu0 0
  %188 = vmatpush.bf16.msra.mxu0 0
  %189 = vmatpush.bf16.msra.mxu0 0
  %190 = vmatpush.bf16.msra.mxu0 0
  %191 = vmatpush.bf16.msra.mxu0 0
  %192 = vmatpush.bf16.msra.mxu0 0
  %193 = vmatpush.bf16.msra.mxu0 %v141
  %194 = vmatpush.bf16.msra.mxu0 %v140
  %195 = vmatmul.bf16.gmra.mxu0 %v182
  %v196 = vpop.f32.mrf.mxu0
  %v197 = vadd.f32 %v153, %v196
  %v198 = vpop.f32.mrf.mxu0
  %v199 = vadd.f32 %v158, %v198
  %200 = vmatmul.bf16.gmra.mxu0 %v185
  %v201 = vpop.f32.mrf.mxu0
  %v202 = vadd.f32 %v163, %v201
  %v203 = vpop.f32.mrf.mxu0
  %v204 = vadd.f32 %v168, %v203
  %205 = vdwg.mxu0
  %v206 = vmax.f32 %v197, 0.0
  %v207 = vmax.f32 %v199, 0.0
  %v208 = vmax.f32 %v202, 0.0
  %v209 = vmax.f32 %v204, 0.0
  %v210 = vld [vmem:[%s5] sm:$0xff]
  %v211 = vld [vmem:[%s5 + $0x8] sm:$0xff]
  %v212 = vld [vmem:[%s5 + $0x10] sm:$0xff]
  %v213 = vld [vmem:[%s5 + $0x18] sm:$0xff]
  %215 = vset.pattern.permute.xlu0 0
  %216 = vperm.xlu0 %215, %v210
  %v217 = vpop.permute.xlu0 %216
  %220 = vset.pattern.permute.xlu0 0
  %221 = vperm.xlu0 %220, %v211
  %v222 = vpop.permute.xlu0 %221
  %225 = vset.pattern.permute.xlu0 0
  %226 = vperm.xlu0 %225, %v212
  %v227 = vpop.permute.xlu0 %226
  %230 = vset.pattern.permute.xlu0 0
  %231 = vperm.xlu0 %230, %v213
  %v232 = vpop.permute.xlu0 %231
  %v234 = vmul.f32 %v206, %v217
  %v235 = vmul.f32 %v207, %v222
  %v236 = vmul.f32 %v208, %v227
  %v237 = vmul.f32 %v209, %v232
  %v238 = vadd.f32 %v234, %v235
  %v239 = vadd.f32 %v238, %v236
  %v240 = vadd.f32 %v239, %v237
  %v241 = vrot.slane %v240, 4
  %v242 = vadd.f32 %v240, %v241
  %v243 = vrot.slane %v242, 2
  %v244 = vadd.f32 %v242, %v243
  %v245 = vrot.slane %v244, 1
  %v246 = vadd.f32 %v244, %v245
  %247 = vst [vmem:[%s6] sm:$0x1] %v246
  // Predicated region
  $region26: #{shallow_network_forward.1} parent=0 // pred_check
    _
  $region27: #{shallow_network_forward.1} parent=0 // pred_check_branch
    %249 = sbr.rel (0) target = $region29
  $region28: #{shallow_network_forward.1} parent=0 // pred_region
    _
  $region29: #{shallow_network_forward.1} parent=0 // pred_fallthru
    _
  // Predicated region
  $region30: #{shallow_network_forward.1} parent=0 // pred_check
    _
  $region31: #{shallow_network_forward.1} parent=0 // pred_check_branch
    %251 = sbr.rel (0) target = $region33
  $region32: #{shallow_network_forward.1} parent=0 // pred_region
    _
  $region33: #{shallow_network_forward.1} parent=0 // pred_fallthru
    _

</llo_original>
